<compile_context>
chip_gen: v7x
topology: tpu7x:2x2x1
jax: 0.10.0
libtpu: 0.0.40
codegen_flags: <defaults>
</compile_context>

<pallas_src>
import math
import functools

import jax
import jax.numpy as jnp
from jax import lax
from jax.experimental import pallas as pl
from jax.experimental.pallas import tpu as pltpu

# ---- config consistent with the PyTorch module ----
D_MODEL = 32
SEQ_L = 8
N_HEAD = 4
HEAD_SIZE = D_MODEL // N_HEAD      # 8
BATCH = 2
LN_EPS = 1e-5                      # PyTorch nn.LayerNorm default

USE_BF16_MATMUL = True             # bf16 MXU path (f32 accumulation); set False for f32-exact
_MASK_ROW = 8                      # sublane-aligned row where the additive mask starts in the slab


def _layer_norm(v, g, b):
    mu = jnp.mean(v, axis=-1, keepdims=True)
    var = jnp.mean((v - mu) * (v - mu), axis=-1, keepdims=True)
    inv = lax.rsqrt(var + LN_EPS)
    return (v - mu) * inv * g + b


def block_kernel(x_ref, wattn_ref, w1_ref, w2_ref, pslab_ref, out_ref, *,
                 n_head, head_size, use_concat, mm_dtype):
    x = x_ref[...].astype(jnp.float32)                   # (B*L, D)
    BL, D = x.shape
    HHS = n_head * head_size

    # ---------- unpack the parameter slab (static slices, near-zero cost) ----------
    ln1g = pslab_ref[0:1, 0:D]
    ln1b = pslab_ref[0:1, D:2 * D]
    b0   = pslab_ref[0:1, 2 * D:3 * D]
    ln2g = pslab_ref[0:1, 3 * D:4 * D]
    ln2b = pslab_ref[1:2, 0:D]
    b2   = pslab_ref[1:2, D:2 * D]
    b1   = pslab_ref[2:3, 0:4 * D]
    bias = pslab_ref[_MASK_ROW:_MASK_ROW + BL, 0:BL]     # additive 0 / -1e30 mask (BL, BL)

    w_attn = wattn_ref[...]                              # (D, 3*H*hs + D), mm_dtype
    w_qkv = w_attn[:, 0:3 * HHS]                         # fused QKV weight (scale folded into Wq)
    w0    = w_attn[:, 3 * HHS:3 * HHS + D]               # output projection weight (H*hs, D)

    # ---------- LayerNorm 1 + fused QKV projection (one MXU matmul) ----------
    xn = _layer_norm(x, ln1g, ln1b)
    qkv = jnp.dot(xn.astype(mm_dtype), w_qkv, preferred_element_type=jnp.float32)  # (BL, 3*H*hs)

    # ---------- attention: all B*L rows at once, per-head static unroll ----------
    zs = []
    for h in range(n_head):
        q_h = qkv[:, h * head_size:(h + 1) * head_size]
        k_h = qkv[:, HHS + h * head_size:HHS + (h + 1) * head_size]
        v_h = qkv[:, 2 * HHS + h * head_size:2 * HHS + (h + 1) * head_size]

        s = jnp.dot(q_h.astype(mm_dtype), k_h.astype(mm_dtype).T,
                    preferred_element_type=jnp.float32)              # (BL, BL)
        s = s + bias                                                  # batch-block + causal mask
        m = jnp.max(s, axis=-1, keepdims=True)
        e = jnp.exp(s - m)
        denom = jnp.sum(e, axis=-1, keepdims=True)
        p = e * pl.reciprocal(denom, approx=False)                    # masked entries exactly 0
        zs.append(jnp.dot(p.astype(mm_dtype), v_h.astype(mm_dtype),
                          preferred_element_type=jnp.float32))        # (BL, hs)

    if use_concat:
        # v5e/v6e: lane concat (XLU slot) + single MXU matmul -> one MRF drain
        zcat = jnp.concatenate(zs, axis=-1).astype(mm_dtype)          # (BL, H*hs)
        attn = jnp.dot(zcat, w0, preferred_element_type=jnp.float32)
    else:
        # v7x: accumulating pushes are cheap (MRB in-place accumulate)
        attn = jnp.zeros((BL, D), jnp.float32)
        for h in range(n_head):
            attn = attn + jnp.dot(zs[h].astype(mm_dtype),
                                  w0[h * head_size:(h + 1) * head_size, :],
                                  preferred_element_type=jnp.float32)
    attn = attn + b0

    x1 = x + attn                                        # residual 1

    # ---------- LayerNorm 2 + FeedForward ----------
    x2n = _layer_norm(x1, ln2g, ln2b)
    hmid = jnp.dot(x2n.astype(mm_dtype), w1_ref[...],
                   preferred_element_type=jnp.float32) + b1           # (BL, 4D)
    hmid = jnp.maximum(hmid, 0.0)
    ffn = jnp.dot(hmid.astype(mm_dtype), w2_ref[...],
                  preferred_element_type=jnp.float32) + b2            # (BL, D)
    # TODO(synk): nn.Dropout is identity at inference/eval time, so it is omitted here.

    out_ref[...] = (x1 + ffn).astype(out_ref.dtype)      # residual 2


def block_forward(x, params):
    (ln1g, ln1b, wq, wk, wv, w0_t, b0, ln2g, ln2b, w1, b1, w2, b2) = params
    B, L, D = x.shape
    H, _, hs = wq.shape
    BL = B * L
    mm_dtype = jnp.bfloat16 if USE_BF16_MATMUL else jnp.float32

    # chip-aware output-projection structure (MRF chips prefer concat+single matmul, MRB prefers accumulate)
    try:
        dk = jax.devices()[0].device_kind.lower()
    except Exception:
        dk = ""
    use_concat = not ("v7" in dk or "7x" in dk)

    # ---- fused attention weight: [Wq*scale | Wk | Wv | W0], head-major columns ----
    def head_major(w):                                   # (H, D, hs) -> (D, H*hs), col = h*hs + t
        return jnp.transpose(w, (1, 0, 2)).reshape(D, H * hs)
    scale = 1.0 / math.sqrt(hs)
    w_attn = jnp.concatenate(
        [head_major(wq) * scale, head_major(wk), head_major(wv), w0_t],
        axis=-1).astype(mm_dtype)                        # (D, 3*H*hs + D) = (32, 128)

    # ---- one pre-padded (rows, 128) f32 slab: all small vectors + additive attention mask ----
    pslab = jnp.zeros((_MASK_ROW + BL, 128), jnp.float32)
    pslab = pslab.at[0, 0:D].set(ln1g[0])
    pslab = pslab.at[0, D:2 * D].set(ln1b[0])
    pslab = pslab.at[0, 2 * D:3 * D].set(b0[0])
    pslab = pslab.at[0, 3 * D:4 * D].set(ln2g[0])
    pslab = pslab.at[1, 0:D].set(ln2b[0])
    pslab = pslab.at[1, D:2 * D].set(b2[0])
    pslab = pslab.at[2, 0:4 * D].set(b1[0])
    r = jnp.arange(BL)
    valid = ((r[:, None] // L) == (r[None, :] // L)) & ((r[None, :] % L) <= (r[:, None] % L))
    pslab = pslab.at[_MASK_ROW:_MASK_ROW + BL, 0:BL].set(
        jnp.where(valid, 0.0, -1e30).astype(jnp.float32))

    x2d = x.reshape(BL, D)                               # flatten batch into sublanes (outside kernel)

    kernel = functools.partial(block_kernel, n_head=H, head_size=hs,
                               use_concat=use_concat, mm_dtype=mm_dtype)
    vmem_spec = lambda: pl.BlockSpec(memory_space=pltpu.MemorySpace.VMEM)

    out2d = pl.pallas_call(
        kernel,
        out_shape=jax.ShapeDtypeStruct((BL, D), x.dtype),
        in_specs=[vmem_spec() for _ in range(5)],
        out_specs=vmem_spec(),
    )(x2d, w_attn, w1.astype(mm_dtype), w2.astype(mm_dtype), pslab)

    return out2d.reshape(B, L, D)


def reference_block(x, params):
    # pure-JAX f32 reference mirroring the PyTorch Block.forward exactly
    (ln1g, ln1b, wq, wk, wv, w0_t, b0, ln2g, ln2b, w1, b1, w2, b2) = params
    B, L, D = x.shape
    H, _, hs = wq.shape

    def ln(v, g, b):
        mu = v.mean(-1, keepdims=True)
        var = ((v - mu) ** 2).mean(-1, keepdims=True)
        return (v - mu) / jnp.sqrt(var + LN_EPS) * g + b

    xn = ln(x, ln1g[0], ln1b[0])
    mask = jnp.tril(jnp.ones((L, L), dtype=bool))
    heads = []
    for h in range(H):
        q = xn @ wq[h]
        k = xn @ wk[h]
        v = xn @ wv[h]
        s = (q @ jnp.swapaxes(k, -1, -2)) / math.sqrt(hs)
        s = jnp.where(mask, s, -jnp.inf)
        p = jax.nn.softmax(s, axis=-1)
        heads.append(p @ v)
    att = jnp.concatenate(heads, axis=-1) @ w0_t + b0[0]
    x1 = x + att
    x2n = ln(x1, ln2g[0], ln2b[0])
    ffn = jnp.maximum(x2n @ w1 + b1[0], 0.0) @ w2 + b2[0]
    return x1 + ffn


if __name__ == "__main__":
    key = jax.random.PRNGKey(0)
    ks = jax.random.split(key, 16)

    x = jax.random.normal(ks[0], (BATCH, SEQ_L, D_MODEL), dtype=jnp.float32)

    wq = jax.random.normal(ks[1], (N_HEAD, D_MODEL, HEAD_SIZE), jnp.float32) * 0.1
    wk = jax.random.normal(ks[2], (N_HEAD, D_MODEL, HEAD_SIZE), jnp.float32) * 0.1
    wv = jax.random.normal(ks[3], (N_HEAD, D_MODEL, HEAD_SIZE), jnp.float32) * 0.1
    w0_t = jax.random.normal(ks[4], (N_HEAD * HEAD_SIZE, D_MODEL), jnp.float32) * 0.1
    b0 = jax.random.normal(ks[5], (1, D_MODEL), jnp.float32) * 0.1

    ln1g = 1.0 + 0.1 * jax.random.normal(ks[6], (1, D_MODEL), jnp.float32)
    ln1b = 0.1 * jax.random.normal(ks[7], (1, D_MODEL), jnp.float32)
    ln2g = 1.0 + 0.1 * jax.random.normal(ks[8], (1, D_MODEL), jnp.float32)
    ln2b = 0.1 * jax.random.normal(ks[9], (1, D_MODEL), jnp.float32)

    w1 = jax.random.normal(ks[10], (D_MODEL, 4 * D_MODEL), jnp.float32) * 0.1
    b1 = 0.1 * jax.random.normal(ks[11], (1, 4 * D_MODEL), jnp.float32)
    w2 = jax.random.normal(ks[12], (4 * D_MODEL, D_MODEL), jnp.float32) * 0.1
    b2 = 0.1 * jax.random.normal(ks[13], (1, D_MODEL), jnp.float32)

    params = (ln1g, ln1b, wq, wk, wv, w0_t, b0, ln2g, ln2b, w1, b1, w2, b2)

    out = block_forward(x, params)
    out = jax.block_until_ready(out)

    ref = reference_block(x, params)
    # bf16 MXU path introduces ~O(1e-3..1e-2) absolute deviation vs the f32 reference;
    # with USE_BF16_MATMUL=False the kernel matches to 2e-3.
    tol = 2e-2 if USE_BF16_MATMUL else 2e-3
    assert out.shape == (BATCH, SEQ_L, D_MODEL)
    assert jnp.allclose(out, ref, atol=tol, rtol=tol), (
        "mismatch vs JAX reference, max abs diff = %g" % float(jnp.max(jnp.abs(out - ref))))

    print("KERNEL_OK")
</pallas_src>

<mosaic_0001>
module attributes {stable_mosaic.version = 11 : i64} {
  func.func @block_kernel(%arg0: memref<16x32xf32, #tpu.memory_space<vmem>>, %arg1: memref<32x128xbf16, #tpu.memory_space<vmem>>, %arg2: memref<32x128xbf16, #tpu.memory_space<vmem>>, %arg3: memref<128x32xbf16, #tpu.memory_space<vmem>>, %arg4: memref<24x128xf32, #tpu.memory_space<vmem>>, %arg5: memref<16x32xf32, #tpu.memory_space<vmem>>) attributes {dimension_semantics = [], scalar_prefetch = 0 : i64, scratch_operands = 0 : i64, tpu.core_type = #tpu.core_type<tc>} {
    %c0 = arith.constant 0 : index
    %c0_0 = arith.constant 0 : index
    %0 = vector.load %arg0[%c0, %c0_0] : memref<16x32xf32, #tpu.memory_space<vmem>>, vector<16x32xf32>
    %c0_1 = arith.constant 0 : index
    %c0_2 = arith.constant 0 : index
    %1 = vector.load %arg4[%c0_1, %c0_2] : memref<24x128xf32, #tpu.memory_space<vmem>>, vector<1x32xf32>
    %c0_3 = arith.constant 0 : index
    %c32 = arith.constant 32 : index
    %2 = vector.load %arg4[%c0_3, %c32] : memref<24x128xf32, #tpu.memory_space<vmem>>, vector<1x32xf32>
    %c0_4 = arith.constant 0 : index
    %c64 = arith.constant 64 : index
    %3 = vector.load %arg4[%c0_4, %c64] : memref<24x128xf32, #tpu.memory_space<vmem>>, vector<1x32xf32>
    %c0_5 = arith.constant 0 : index
    %c96 = arith.constant 96 : index
    %4 = vector.load %arg4[%c0_5, %c96] : memref<24x128xf32, #tpu.memory_space<vmem>>, vector<1x32xf32>
    %c1 = arith.constant 1 : index
    %c0_6 = arith.constant 0 : index
    %5 = vector.load %arg4[%c1, %c0_6] : memref<24x128xf32, #tpu.memory_space<vmem>>, vector<1x32xf32>
    %c1_7 = arith.constant 1 : index
    %c32_8 = arith.constant 32 : index
    %6 = vector.load %arg4[%c1_7, %c32_8] : memref<24x128xf32, #tpu.memory_space<vmem>>, vector<1x32xf32>
    %c2 = arith.constant 2 : index
    %c0_9 = arith.constant 0 : index
    %7 = vector.load %arg4[%c2, %c0_9] : memref<24x128xf32, #tpu.memory_space<vmem>>, vector<1x128xf32>
    %c8 = arith.constant 8 : index
    %c0_10 = arith.constant 0 : index
    %8 = vector.load %arg4[%c8, %c0_10] : memref<24x128xf32, #tpu.memory_space<vmem>>, vector<16x16xf32>
    %c0_11 = arith.constant 0 : index
    %c0_12 = arith.constant 0 : index
    %9 = vector.load %arg1[%c0_11, %c0_12] : memref<32x128xbf16, #tpu.memory_space<vmem>>, vector<32x128xbf16>
    %10 = vector.extract_strided_slice %9 {offsets = [0, 0], sizes = [32, 96], strides = [1, 1]} : vector<32x128xbf16> to vector<32x96xbf16>
    %11 = vector.extract_strided_slice %9 {offsets = [0, 96], sizes = [32, 32], strides = [1, 1]} : vector<32x128xbf16> to vector<32x32xbf16>
    %cst = arith.constant dense<0.000000e+00> : vector<16xf32>
    %12 = vector.multi_reduction <add>, %0, %cst [1] : vector<16x32xf32> to vector<16xf32>
    %13 = vector.shape_cast %12 : vector<16xf32> to vector<16x1xf32>
    %cst_13 = arith.constant 3.200000e+01 : f32
    %14 = vector.broadcast %cst_13 : f32 to vector<16x1xf32>
    %15 = arith.divf %13, %14 : vector<16x1xf32>
    %16 = vector.broadcast %15 : vector<16x1xf32> to vector<16x32xf32>
    %17 = arith.subf %0, %16 : vector<16x32xf32>
    %18 = vector.broadcast %15 : vector<16x1xf32> to vector<16x32xf32>
    %19 = arith.subf %0, %18 : vector<16x32xf32>
    %20 = arith.mulf %17, %19 : vector<16x32xf32>
    %cst_14 = arith.constant dense<0.000000e+00> : vector<16xf32>
    %21 = vector.multi_reduction <add>, %20, %cst_14 [1] : vector<16x32xf32> to vector<16xf32>
    %22 = vector.shape_cast %21 : vector<16xf32> to vector<16x1xf32>
    %cst_15 = arith.constant 3.200000e+01 : f32
    %23 = vector.broadcast %cst_15 : f32 to vector<16x1xf32>
    %24 = arith.divf %22, %23 : vector<16x1xf32>
    %cst_16 = arith.constant 9.99999974E-6 : f32
    %25 = vector.broadcast %cst_16 : f32 to vector<16x1xf32>
    %26 = arith.addf %24, %25 : vector<16x1xf32>
    %27 = math.rsqrt %26 : vector<16x1xf32>
    %28 = vector.broadcast %15 : vector<16x1xf32> to vector<16x32xf32>
    %29 = arith.subf %0, %28 : vector<16x32xf32>
    %30 = vector.broadcast %27 : vector<16x1xf32> to vector<16x32xf32>
    %31 = arith.mulf %29, %30 : vector<16x32xf32>
    %32 = vector.broadcast %1 : vector<1x32xf32> to vector<16x32xf32>
    %33 = arith.mulf %31, %32 : vector<16x32xf32>
    %34 = vector.broadcast %2 : vector<1x32xf32> to vector<16x32xf32>
    %35 = arith.addf %33, %34 : vector<16x32xf32>
    %36 = arith.truncf %35 : vector<16x32xf32> to vector<16x32xbf16>
    %cst_17 = arith.constant dense<0.000000e+00> : vector<16x96xf32>
    %37 = tpu.matmul %36, %10, %cst_17 {dimension_numbers = #tpu.dot_dimension_numbers<[1], [0], [0], [1], [0, 0, 1, 1], [], []>} : vector<16x32xbf16>, vector<32x96xbf16>, vector<16x96xf32> -> vector<16x96xf32>
    %38 = vector.extract_strided_slice %37 {offsets = [0, 0], sizes = [16, 8], strides = [1, 1]} : vector<16x96xf32> to vector<16x8xf32>
    %39 = vector.extract_strided_slice %37 {offsets = [0, 32], sizes = [16, 8], strides = [1, 1]} : vector<16x96xf32> to vector<16x8xf32>
    %40 = vector.extract_strided_slice %37 {offsets = [0, 64], sizes = [16, 8], strides = [1, 1]} : vector<16x96xf32> to vector<16x8xf32>
    %41 = arith.truncf %38 : vector<16x8xf32> to vector<16x8xbf16>
    %42 = arith.truncf %39 : vector<16x8xf32> to vector<16x8xbf16>
    %43 = tpu.transpose %42, [1, 0] : vector<16x8xbf16> -> vector<8x16xbf16>
    %cst_18 = arith.constant dense<0.000000e+00> : vector<16x16xf32>
    %44 = tpu.matmul %41, %43, %cst_18 {dimension_numbers = #tpu.dot_dimension_numbers<[1], [0], [0], [1], [0, 0, 1, 1], [], []>} : vector<16x8xbf16>, vector<8x16xbf16>, vector<16x16xf32> -> vector<16x16xf32>
    %45 = arith.addf %44, %8 : vector<16x16xf32>
    %cst_19 = arith.constant dense<0xFF800000> : vector<16xf32>
    %46 = vector.multi_reduction <maximumf>, %45, %cst_19 [1] : vector<16x16xf32> to vector<16xf32>
    %47 = vector.shape_cast %46 : vector<16xf32> to vector<16x1xf32>
    %48 = vector.broadcast %47 : vector<16x1xf32> to vector<16x16xf32>
    %49 = arith.subf %45, %48 : vector<16x16xf32>
    %50 = math.exp %49 : vector<16x16xf32>
    %cst_20 = arith.constant dense<0.000000e+00> : vector<16xf32>
    %51 = vector.multi_reduction <add>, %50, %cst_20 [1] : vector<16x16xf32> to vector<16xf32>
    %52 = vector.shape_cast %51 : vector<16xf32> to vector<16x1xf32>
    %53 = tpu.reciprocal %52 : vector<16x1xf32> -> vector<16x1xf32>
    %54 = vector.broadcast %53 : vector<16x1xf32> to vector<16x16xf32>
    %55 = arith.mulf %50, %54 : vector<16x16xf32>
    %56 = arith.truncf %55 : vector<16x16xf32> to vector<16x16xbf16>
    %57 = arith.truncf %40 : vector<16x8xf32> to vector<16x8xbf16>
    %cst_21 = arith.constant dense<0.000000e+00> : vector<16x8xf32>
    %58 = tpu.matmul %56, %57, %cst_21 {dimension_numbers = #tpu.dot_dimension_numbers<[1], [0], [0], [1], [0, 0, 1, 1], [], []>} : vector<16x16xbf16>, vector<16x8xbf16>, vector<16x8xf32> -> vector<16x8xf32>
    %59 = vector.extract_strided_slice %37 {offsets = [0, 8], sizes = [16, 8], strides = [1, 1]} : vector<16x96xf32> to vector<16x8xf32>
    %60 = vector.extract_strided_slice %37 {offsets = [0, 40], sizes = [16, 8], strides = [1, 1]} : vector<16x96xf32> to vector<16x8xf32>
    %61 = vector.extract_strided_slice %37 {offsets = [0, 72], sizes = [16, 8], strides = [1, 1]} : vector<16x96xf32> to vector<16x8xf32>
    %62 = arith.truncf %59 : vector<16x8xf32> to vector<16x8xbf16>
    %63 = arith.truncf %60 : vector<16x8xf32> to vector<16x8xbf16>
    %64 = tpu.transpose %63, [1, 0] : vector<16x8xbf16> -> vector<8x16xbf16>
    %cst_22 = arith.constant dense<0.000000e+00> : vector<16x16xf32>
    %65 = tpu.matmul %62, %64, %cst_22 {dimension_numbers = #tpu.dot_dimension_numbers<[1], [0], [0], [1], [0, 0, 1, 1], [], []>} : vector<16x8xbf16>, vector<8x16xbf16>, vector<16x16xf32> -> vector<16x16xf32>
    %66 = arith.addf %65, %8 : vector<16x16xf32>
    %cst_23 = arith.constant dense<0xFF800000> : vector<16xf32>
    %67 = vector.multi_reduction <maximumf>, %66, %cst_23 [1] : vector<16x16xf32> to vector<16xf32>
    %68 = vector.shape_cast %67 : vector<16xf32> to vector<16x1xf32>
    %69 = vector.broadcast %68 : vector<16x1xf32> to vector<16x16xf32>
    %70 = arith.subf %66, %69 : vector<16x16xf32>
    %71 = math.exp %70 : vector<16x16xf32>
    %cst_24 = arith.constant dense<0.000000e+00> : vector<16xf32>
    %72 = vector.multi_reduction <add>, %71, %cst_24 [1] : vector<16x16xf32> to vector<16xf32>
    %73 = vector.shape_cast %72 : vector<16xf32> to vector<16x1xf32>
    %74 = tpu.reciprocal %73 : vector<16x1xf32> -> vector<16x1xf32>
    %75 = vector.broadcast %74 : vector<16x1xf32> to vector<16x16xf32>
    %76 = arith.mulf %71, %75 : vector<16x16xf32>
    %77 = arith.truncf %76 : vector<16x16xf32> to vector<16x16xbf16>
    %78 = arith.truncf %61 : vector<16x8xf32> to vector<16x8xbf16>
    %cst_25 = arith.constant dense<0.000000e+00> : vector<16x8xf32>
    %79 = tpu.matmul %77, %78, %cst_25 {dimension_numbers = #tpu.dot_dimension_numbers<[1], [0], [0], [1], [0, 0, 1, 1], [], []>} : vector<16x16xbf16>, vector<16x8xbf16>, vector<16x8xf32> -> vector<16x8xf32>
    %80 = vector.extract_strided_slice %37 {offsets = [0, 16], sizes = [16, 8], strides = [1, 1]} : vector<16x96xf32> to vector<16x8xf32>
    %81 = vector.extract_strided_slice %37 {offsets = [0, 48], sizes = [16, 8], strides = [1, 1]} : vector<16x96xf32> to vector<16x8xf32>
    %82 = vector.extract_strided_slice %37 {offsets = [0, 80], sizes = [16, 8], strides = [1, 1]} : vector<16x96xf32> to vector<16x8xf32>
    %83 = arith.truncf %80 : vector<16x8xf32> to vector<16x8xbf16>
    %84 = arith.truncf %81 : vector<16x8xf32> to vector<16x8xbf16>
    %85 = tpu.transpose %84, [1, 0] : vector<16x8xbf16> -> vector<8x16xbf16>
    %cst_26 = arith.constant dense<0.000000e+00> : vector<16x16xf32>
    %86 = tpu.matmul %83, %85, %cst_26 {dimension_numbers = #tpu.dot_dimension_numbers<[1], [0], [0], [1], [0, 0, 1, 1], [], []>} : vector<16x8xbf16>, vector<8x16xbf16>, vector<16x16xf32> -> vector<16x16xf32>
    %87 = arith.addf %86, %8 : vector<16x16xf32>
    %cst_27 = arith.constant dense<0xFF800000> : vector<16xf32>
    %88 = vector.multi_reduction <maximumf>, %87, %cst_27 [1] : vector<16x16xf32> to vector<16xf32>
    %89 = vector.shape_cast %88 : vector<16xf32> to vector<16x1xf32>
    %90 = vector.broadcast %89 : vector<16x1xf32> to vector<16x16xf32>
    %91 = arith.subf %87, %90 : vector<16x16xf32>
    %92 = math.exp %91 : vector<16x16xf32>
    %cst_28 = arith.constant dense<0.000000e+00> : vector<16xf32>
    %93 = vector.multi_reduction <add>, %92, %cst_28 [1] : vector<16x16xf32> to vector<16xf32>
    %94 = vector.shape_cast %93 : vector<16xf32> to vector<16x1xf32>
    %95 = tpu.reciprocal %94 : vector<16x1xf32> -> vector<16x1xf32>
    %96 = vector.broadcast %95 : vector<16x1xf32> to vector<16x16xf32>
    %97 = arith.mulf %92, %96 : vector<16x16xf32>
    %98 = arith.truncf %97 : vector<16x16xf32> to vector<16x16xbf16>
    %99 = arith.truncf %82 : vector<16x8xf32> to vector<16x8xbf16>
    %cst_29 = arith.constant dense<0.000000e+00> : vector<16x8xf32>
    %100 = tpu.matmul %98, %99, %cst_29 {dimension_numbers = #tpu.dot_dimension_numbers<[1], [0], [0], [1], [0, 0, 1, 1], [], []>} : vector<16x16xbf16>, vector<16x8xbf16>, vector<16x8xf32> -> vector<16x8xf32>
    %101 = vector.extract_strided_slice %37 {offsets = [0, 24], sizes = [16, 8], strides = [1, 1]} : vector<16x96xf32> to vector<16x8xf32>
    %102 = vector.extract_strided_slice %37 {offsets = [0, 56], sizes = [16, 8], strides = [1, 1]} : vector<16x96xf32> to vector<16x8xf32>
    %103 = vector.extract_strided_slice %37 {offsets = [0, 88], sizes = [16, 8], strides = [1, 1]} : vector<16x96xf32> to vector<16x8xf32>
    %104 = arith.truncf %101 : vector<16x8xf32> to vector<16x8xbf16>
    %105 = arith.truncf %102 : vector<16x8xf32> to vector<16x8xbf16>
    %106 = tpu.transpose %105, [1, 0] : vector<16x8xbf16> -> vector<8x16xbf16>
    %cst_30 = arith.constant dense<0.000000e+00> : vector<16x16xf32>
    %107 = tpu.matmul %104, %106, %cst_30 {dimension_numbers = #tpu.dot_dimension_numbers<[1], [0], [0], [1], [0, 0, 1, 1], [], []>} : vector<16x8xbf16>, vector<8x16xbf16>, vector<16x16xf32> -> vector<16x16xf32>
    %108 = arith.addf %107, %8 : vector<16x16xf32>
    %cst_31 = arith.constant dense<0xFF800000> : vector<16xf32>
    %109 = vector.multi_reduction <maximumf>, %108, %cst_31 [1] : vector<16x16xf32> to vector<16xf32>
    %110 = vector.shape_cast %109 : vector<16xf32> to vector<16x1xf32>
    %111 = vector.broadcast %110 : vector<16x1xf32> to vector<16x16xf32>
    %112 = arith.subf %108, %111 : vector<16x16xf32>
    %113 = math.exp %112 : vector<16x16xf32>
    %cst_32 = arith.constant dense<0.000000e+00> : vector<16xf32>
    %114 = vector.multi_reduction <add>, %113, %cst_32 [1] : vector<16x16xf32> to vector<16xf32>
    %115 = vector.shape_cast %114 : vector<16xf32> to vector<16x1xf32>
    %116 = tpu.reciprocal %115 : vector<16x1xf32> -> vector<16x1xf32>
    %117 = vector.broadcast %116 : vector<16x1xf32> to vector<16x16xf32>
    %118 = arith.mulf %113, %117 : vector<16x16xf32>
    %119 = arith.truncf %118 : vector<16x16xf32> to vector<16x16xbf16>
    %120 = arith.truncf %103 : vector<16x8xf32> to vector<16x8xbf16>
    %cst_33 = arith.constant dense<0.000000e+00> : vector<16x8xf32>
    %121 = tpu.matmul %119, %120, %cst_33 {dimension_numbers = #tpu.dot_dimension_numbers<[1], [0], [0], [1], [0, 0, 1, 1], [], []>} : vector<16x16xbf16>, vector<16x8xbf16>, vector<16x8xf32> -> vector<16x8xf32>
    %122 = tpu.concatenate %58, %79, %100, %121 in 1 : vector<16x8xf32>, vector<16x8xf32>, vector<16x8xf32>, vector<16x8xf32> -> vector<16x32xf32>
    %123 = arith.truncf %122 : vector<16x32xf32> to vector<16x32xbf16>
    %cst_34 = arith.constant dense<0.000000e+00> : vector<16x32xf32>
    %124 = tpu.matmul %123, %11, %cst_34 {dimension_numbers = #tpu.dot_dimension_numbers<[1], [0], [0], [1], [0, 0, 1, 1], [], []>} : vector<16x32xbf16>, vector<32x32xbf16>, vector<16x32xf32> -> vector<16x32xf32>
    %125 = vector.broadcast %3 : vector<1x32xf32> to vector<16x32xf32>
    %126 = arith.addf %124, %125 : vector<16x32xf32>
    %127 = arith.addf %0, %126 : vector<16x32xf32>
    %cst_35 = arith.constant dense<0.000000e+00> : vector<16xf32>
    %128 = vector.multi_reduction <add>, %127, %cst_35 [1] : vector<16x32xf32> to vector<16xf32>
    %129 = vector.shape_cast %128 : vector<16xf32> to vector<16x1xf32>
    %cst_36 = arith.constant 3.200000e+01 : f32
    %130 = vector.broadcast %cst_36 : f32 to vector<16x1xf32>
    %131 = arith.divf %129, %130 : vector<16x1xf32>
    %132 = vector.broadcast %131 : vector<16x1xf32> to vector<16x32xf32>
    %133 = arith.subf %127, %132 : vector<16x32xf32>
    %134 = vector.broadcast %131 : vector<16x1xf32> to vector<16x32xf32>
    %135 = arith.subf %127, %134 : vector<16x32xf32>
    %136 = arith.mulf %133, %135 : vector<16x32xf32>
    %cst_37 = arith.constant dense<0.000000e+00> : vector<16xf32>
    %137 = vector.multi_reduction <add>, %136, %cst_37 [1] : vector<16x32xf32> to vector<16xf32>
    %138 = vector.shape_cast %137 : vector<16xf32> to vector<16x1xf32>
    %cst_38 = arith.constant 3.200000e+01 : f32
    %139 = vector.broadcast %cst_38 : f32 to vector<16x1xf32>
    %140 = arith.divf %138, %139 : vector<16x1xf32>
    %cst_39 = arith.constant 9.99999974E-6 : f32
    %141 = vector.broadcast %cst_39 : f32 to vector<16x1xf32>
    %142 = arith.addf %140, %141 : vector<16x1xf32>
    %143 = math.rsqrt %142 : vector<16x1xf32>
    %144 = vector.broadcast %131 : vector<16x1xf32> to vector<16x32xf32>
    %145 = arith.subf %127, %144 : vector<16x32xf32>
    %146 = vector.broadcast %143 : vector<16x1xf32> to vector<16x32xf32>
    %147 = arith.mulf %145, %146 : vector<16x32xf32>
    %148 = vector.broadcast %4 : vector<1x32xf32> to vector<16x32xf32>
    %149 = arith.mulf %147, %148 : vector<16x32xf32>
    %150 = vector.broadcast %5 : vector<1x32xf32> to vector<16x32xf32>
    %151 = arith.addf %149, %150 : vector<16x32xf32>
    %152 = arith.truncf %151 : vector<16x32xf32> to vector<16x32xbf16>
    %c0_40 = arith.constant 0 : index
    %c0_41 = arith.constant 0 : index
    %153 = vector.load %arg2[%c0_40, %c0_41] : memref<32x128xbf16, #tpu.memory_space<vmem>>, vector<32x128xbf16>
    %cst_42 = arith.constant dense<0.000000e+00> : vector<16x128xf32>
    %154 = tpu.matmul %152, %153, %cst_42 {dimension_numbers = #tpu.dot_dimension_numbers<[1], [0], [0], [1], [0, 0, 1, 1], [], []>} : vector<16x32xbf16>, vector<32x128xbf16>, vector<16x128xf32> -> vector<16x128xf32>
    %155 = vector.broadcast %7 : vector<1x128xf32> to vector<16x128xf32>
    %156 = arith.addf %154, %155 : vector<16x128xf32>
    %cst_43 = arith.constant 0.000000e+00 : f32
    %157 = vector.broadcast %cst_43 : f32 to vector<16x128xf32>
    %158 = arith.maximumf %156, %157 : vector<16x128xf32>
    %159 = arith.truncf %158 : vector<16x128xf32> to vector<16x128xbf16>
    %c0_44 = arith.constant 0 : index
    %c0_45 = arith.constant 0 : index
    %160 = vector.load %arg3[%c0_44, %c0_45] : memref<128x32xbf16, #tpu.memory_space<vmem>>, vector<128x32xbf16>
    %cst_46 = arith.constant dense<0.000000e+00> : vector<16x32xf32>
    %161 = tpu.matmul %159, %160, %cst_46 {dimension_numbers = #tpu.dot_dimension_numbers<[1], [0], [0], [1], [0, 0, 1, 1], [], []>} : vector<16x128xbf16>, vector<128x32xbf16>, vector<16x32xf32> -> vector<16x32xf32>
    %162 = vector.broadcast %6 : vector<1x32xf32> to vector<16x32xf32>
    %163 = arith.addf %161, %162 : vector<16x32xf32>
    %164 = arith.addf %127, %163 : vector<16x32xf32>
    %c0_47 = arith.constant 0 : index
    %c0_48 = arith.constant 0 : index
    %165 = vector.load %arg5[%c0_47, %c0_48] : memref<16x32xf32, #tpu.memory_space<vmem>>, vector<16x32xf32>
    tpu.vector_store %arg5[%c0_47, %c0_48], %164 {strides = array<i32>} : memref<16x32xf32, #tpu.memory_space<vmem>>, vector<16x32xf32>,
    return
  }
}

</mosaic_0001>

<llo_original>
// kernel: tpu_custom_call.1
$region0: #{tpu_custom_call.1}
  #allocation0 [shape = 'u32[]', space=smem, size = 0x4, offset = 0x4, fixed_abs, tag = 'smem constant byte address 0x4 - core index']
  #allocation1 [shape = 'u32[144,128]{1,0:T(1,128)}', space=vmem, size = 0x12000, scoped, tag = 'internal scratch']
  %s0 = inlined_call_operand.vmem [shape: f32[16,32], index: 0, kind: input, shape index: {}]
  %s1 = inlined_call_operand.vmem [shape: bf16[32,128], index: 1, kind: input, shape index: {}]
  %s2 = inlined_call_operand.vmem [shape: bf16[32,128], index: 2, kind: input, shape index: {}]
  %s3 = inlined_call_operand.vmem [shape: bf16[128,32], index: 3, kind: input, shape index: {}]
  %s4 = inlined_call_operand.vmem [shape: f32[24,128], index: 4, kind: input, shape index: {}]
  %s5 = inlined_call_operand.hbm [shape: f32[16,32], index: 5, kind: output, shape index: {}]
  %s6 = sld [smem:[#allocation0]]
  $region30: #{tpu_custom_call.1} parent=0
    _
  %s8 = ssub.s32 1, %s6
  %s9 = scalar_select 0, %s8, %s6
  $region1: #{tpu_custom_call.1} parent=0
    #allocation2 [shape = 'u8[8192]{0}', space=vmem, size = 0x2000, scoped, tag = 'output window, operand 0, single buffered']
    #allocation3 [shape = 's32[1]{0}', space=sflag, size = 0x4, scoped, tag = 'scoped memory for tpu_custom_call.1']
    %10 = vsyncpa [#allocation3], 0
    // Predicated region
    $region2: #{tpu_custom_call.1} parent=1 // pred_check
      _
    $region3: #{tpu_custom_call.1} parent=1 // pred_check_branch
      %12 = sbr.rel (0) target = $region5
    $region4: #{tpu_custom_call.1} parent=1 // pred_region
      _
    $region5: #{tpu_custom_call.1} parent=1 // pred_fallthru
      _
    // Predicated region
    $region6: #{tpu_custom_call.1} parent=1 // pred_check
      _
    $region7: #{tpu_custom_call.1} parent=1 // pred_check_branch
      %14 = sbr.rel (0) target = $region9
    $region8: #{tpu_custom_call.1} parent=1 // pred_region
      _
    $region9: #{tpu_custom_call.1} parent=1 // pred_fallthru
      _
    // Predicated region
    $region10: #{tpu_custom_call.1} parent=1 // pred_check
      _
    $region11: #{tpu_custom_call.1} parent=1 // pred_check_branch
      %16 = sbr.rel (0) target = $region13
    $region12: #{tpu_custom_call.1} parent=1 // pred_region
      _
    $region13: #{tpu_custom_call.1} parent=1 // pred_fallthru
      _
    // Predicated region
    $region14: #{tpu_custom_call.1} parent=1 // pred_check
      _
    $region15: #{tpu_custom_call.1} parent=1 // pred_check_branch
      %18 = sbr.rel (0) target = $region17
    $region16: #{tpu_custom_call.1} parent=1 // pred_region
      _
    $region17: #{tpu_custom_call.1} parent=1 // pred_fallthru
      _
    // Predicated region
    $region18: #{tpu_custom_call.1} parent=1 // pred_check
      _
    $region19: #{tpu_custom_call.1} parent=1 // pred_check_branch
      %20 = sbr.rel (0) target = $region21
    $region20: #{tpu_custom_call.1} parent=1 // pred_region
      _
    $region21: #{tpu_custom_call.1} parent=1 // pred_fallthru
      _
    %v22 = vld [vmem:[%s0] sm:$0xff]
    %v23 = vld [vmem:[%s0 + $0x8] sm:$0xff]
    %v24 = vld [vmem:[%s4] sm:$0x1]
    %v25 = vld [vmem:[%s4 + $0x1] sm:$0x1]
    %v26 = vld [vmem:[%s4 + $0x2] sm:$0x1]
    %v27 = vld [vmem:[%s4 + $0x8] sm:$0xff]
    %v28 = vld [vmem:[%s4 + $0x10] sm:$0xff]
    %v29 = vld [vmem:[%s1] sm:$0xf]
    %v30 = vld [vmem:[%s1 + $0x4] sm:$0xf]
    %v31 = vld [vmem:[%s1 + $0x8] sm:$0xf]
    %v32 = vld [vmem:[%s1 + $0xc] sm:$0xf]
    %vm33 = vcmask 261120
    %v34 = vsel %vm33, %v22, 0.0
    %35 = vadd.xlane.f32.xlu0 %v34
    %v36 = vpop.xlane.xlu0 %35
    %v37 = vsel %vm33, %v23, 0.0
    %38 = vadd.xlane.f32.xlu0 %v37
    %v39 = vpop.xlane.xlu0 %38
    %v40 = vrcp.pop 32.0
    %v41 = vmul.f32 %v36, %v40
    %v42 = vmul.f32 %v39, %v40
    %v43 = vsub.f32 %v22, %v41
    %v44 = vsub.f32 %v23, %v42
    %v45 = vmul.f32 %v43, %v43
    %v46 = vmul.f32 %v44, %v44
    %v47 = vsel %vm33, %v45, 0.0
    %48 = vadd.xlane.f32.xlu0 %v47
    %v49 = vpop.xlane.xlu0 %48
    %v50 = vsel %vm33, %v46, 0.0
    %51 = vadd.xlane.f32.xlu0 %v50
    %v52 = vpop.xlane.xlu0 %51
    %v53 = vmul.f32 %v49, %v40
    %v54 = vmul.f32 %v52, %v40
    %v55 = vadd.f32 %v53, 1e-05
    %v56 = vadd.f32 %v54, 1e-05
    %v57 = vrsqrt.pop %v55
    %v58 = vrsqrt.pop %v56
    %v59 = vmul.f32 %v43, %v57
    %v60 = vmul.f32 %v44, %v58
    %v61 = vlaneseq
    %v62 = vshrl.u32 %v61, 7
    %v63 = vsub.s32 0, %v62
    %v64 = vrot.slane %v24, %v63
    %v65 = vmul.f32 %v59, %v64
    %v66 = vmul.f32 %v60, %v64
    %68 = vrot.lane.b32.xlu0 %v64, 96
    %v69 = vpop.permute.xlu0 %68
    %v71 = vadd.f32 %v65, %v69
    %v72 = vadd.f32 %v66, %v69
    %v73 = vpack.c.bf16 %v72, %v71
    %v78 = vunpack.c.l.b16 %v29
    %v79 = vunpack.c.l.b16 %v30
    %v80 = vunpack.c.l.b16 %v31
    %v81 = vunpack.c.l.b16 %v32
    %v82 = vpack.c.b16 %v79, %v78
    %v83 = vpack.c.b16 %v81, %v80
    %v87 = vsel %vm33, %v73, 0
    %89 = vmatprep.subr.bf16.mxu0 0
    %90 = vmatpush1.bf16.msra.mxu0 %v82
    %91 = vmatprep.subr.bf16.mxu0 0
    %92 = vmatpush1.bf16.msra.mxu0 %v83
    %93 = vmatprep.subr.bf16.mxu0 0
    %94 = vmatpush1.bf16.msra.mxu0 0
    %95 = vmatprep.subr.bf16.mxu0 0
    %96 = vmatpush1.bf16.msra.mxu0 0
    %97 = vmatprep.subr.bf16.mxu0 0
    %98 = vmatpush1.bf16.msra.mxu0 0
    %99 = vmatprep.subr.bf16.mxu0 0
    %100 = vmatpush1.bf16.msra.mxu0 0
    %101 = vmatprep.subr.bf16.mxu0 0
    %102 = vmatpush1.bf16.msra.mxu0 0
    %103 = vmatprep.subr.bf16.mxu0 0
    %104 = vmatpush1.bf16.msra.mxu0 0
    %105 = vmatprep.subr.bf16.mxu0 0
    %106 = vmatpush1.bf16.msra.mxu0 0
    %107 = vmatprep.subr.bf16.mxu0 0
    %108 = vmatpush1.bf16.msra.mxu0 0
    %109 = vmatprep.subr.bf16.mxu0 0
    %110 = vmatpush1.bf16.msra.mxu0 0
    %111 = vmatprep.subr.bf16.mxu0 0
    %112 = vmatpush1.bf16.msra.mxu0 0
    %113 = vmatprep.subr.bf16.mxu0 0
    %114 = vmatpush1.bf16.msra.mxu0 0
    %115 = vmatprep.subr.bf16.mxu0 0
    %116 = vmatpush1.bf16.msra.mxu0 0
    %117 = vmatprep.subr.bf16.mxu0 0
    %118 = vmatpush1.bf16.msra.mxu0 0
    %119 = vmatprep.subr.bf16.mxu0 0
    %120 = vmatpush1.bf16.msra.mxu0 0
    %121 = vmatprep.mubr.bf16.mxu0 0
    %122 = vmatmul.mubr.bf16.gmra.mrb[0].mxu0 %v87
    %v123 = vpop.f32.mrb[0].mxu0
    %v124 = vadd.f32 0.0, %v123
    %v125 = vpop.f32.mrb[0].mxu0
    %v126 = vpop.f32.mrb[0].mxu0
    %v127 = vadd.f32 0.0, %v126
    %v128 = vpop.f32.mrb[0].mxu0
    %129 = vdwg.mxu0
    %v130 = vpack.c.bf16 %v127, %v124
    %132 = vrot.lane.b32.xlu0 %v130, 96
    %v133 = vpop.permute.xlu0 %132
    %vm134 = vcmask 64512
    %v136 = vsel %vm134, %v130, 0
    %v139 = vsel %vm134, %v133, 0
    %141 = vmatprep.subr.bf16.mxu0 0
    %142 = vmatpush1.bf16.xpose.msra.mxu0 %v139
    %143 = vmatprep.subr.bf16.mxu0 0
    %144 = vmatpush1.bf16.xpose.msra.mxu0 0
    %145 = vmatprep.subr.bf16.mxu0 0
    %146 = vmatpush1.bf16.xpose.msra.mxu0 0
    %147 = vmatprep.subr.bf16.mxu0 0
    %148 = vmatpush1.bf16.xpose.msra.mxu0 0
    %149 = vmatprep.subr.bf16.mxu0 0
    %150 = vmatpush1.bf16.xpose.msra.mxu0 0
    %151 = vmatprep.subr.bf16.mxu0 0
    %152 = vmatpush1.bf16.xpose.msra.mxu0 0
    %153 = vmatprep.subr.bf16.mxu0 0
    %154 = vmatpush1.bf16.xpose.msra.mxu0 0
    %155 = vmatprep.subr.bf16.mxu0 0
    %156 = vmatpush1.bf16.xpose.msra.mxu0 0
    %157 = vmatprep.subr.bf16.mxu0 0
    %158 = vmatpush1.bf16.xpose.msra.mxu0 0
    %159 = vmatprep.subr.bf16.mxu0 0
    %160 = vmatpush1.bf16.xpose.msra.mxu0 0
    %161 = vmatprep.subr.bf16.mxu0 0
    %162 = vmatpush1.bf16.xpose.msra.mxu0 0
    %163 = vmatprep.subr.bf16.mxu0 0
    %164 = vmatpush1.bf16.xpose.msra.mxu0 0
    %165 = vmatprep.subr.bf16.mxu0 0
    %166 = vmatpush1.bf16.xpose.msra.mxu0 0
    %167 = vmatprep.subr.bf16.mxu0 0
    %168 = vmatpush1.bf16.xpose.msra.mxu0 0
    %169 = vmatprep.subr.bf16.mxu0 0
    %170 = vmatpush1.bf16.xpose.msra.mxu0 0
    %171 = vmatprep.subr.bf16.mxu0 0
    %172 = vmatpush1.bf16.xpose.msra.mxu0 0
    %173 = vmatprep.mubr.bf16.mxu0 0
    %174 = vmatmul.mubr.bf16.gmra.mrb[0].mxu0 %v136
    %v175 = vpop.f32.mrb[0].mxu0
    %v176 = vadd.f32 %v27, %v175
    %v177 = vpop.f32.mrb[0].mxu0
    %v178 = vpop.f32.mrb[0].mxu0
    %v179 = vadd.f32 %v28, %v178
    %v180 = vpop.f32.mrb[0].mxu0
    %181 = vdwg.mxu0
    %vm182 = vcmask 130048
    %v183 = vsel %vm182, %v176, -inf
    %184 = vmax.xlane.f32.xlu0 %v183
    %v185 = vpop.xlane.xlu0 %184
    %v186 = vsel %vm182, %v179, -inf
    %187 = vmax.xlane.f32.xlu0 %v186
    %v188 = vpop.xlane.xlu0 %187
    %v189 = vsub.f32 %v176, %v185
    %v190 = vsub.f32 %v179, %v188
    %v191 = vmul.f32 %v189, 1.442695
    %v192 = vpow.pop %v191
    %v193 = vmul.f32 %v190, 1.442695
    %v194 = vpow.pop %v193
    %v195 = vsel %vm182, %v192, 0.0
    %196 = vadd.xlane.f32.xlu0 %v195
    %v197 = vpop.xlane.xlu0 %196
    %v198 = vsel %vm182, %v194, 0.0
    %199 = vadd.xlane.f32.xlu0 %v198
    %v200 = vpop.xlane.xlu0 %199
    %v201 = vrcp.pop %v197
    %v202 = vrcp.pop %v200
    %v203 = vmul.f32 %v192, %v201
    %v204 = vmul.f32 %v194, %v202
    %v205 = vpack.c.bf16 %v204, %v203
    %206 = vrot.lane.b32.xlu0 %v130, 64
    %v207 = vpop.permute.xlu0 %206
    %v210 = vsel %vm182, %v205, 0
    %212 = vmatprep.subr.bf16.mxu0 0
    %213 = vmatpush1.bf16.msra.mxu0 %v207
    %214 = vmatprep.subr.bf16.mxu0 0
    %215 = vmatpush1.bf16.msra.mxu0 0
    %216 = vmatprep.subr.bf16.mxu0 0
    %217 = vmatpush1.bf16.msra.mxu0 0
    %218 = vmatprep.subr.bf16.mxu0 0
    %219 = vmatpush1.bf16.msra.mxu0 0
    %220 = vmatprep.subr.bf16.mxu0 0
    %221 = vmatpush1.bf16.msra.mxu0 0
    %222 = vmatprep.subr.bf16.mxu0 0
    %223 = vmatpush1.bf16.msra.mxu0 0
    %224 = vmatprep.subr.bf16.mxu0 0
    %225 = vmatpush1.bf16.msra.mxu0 0
    %226 = vmatprep.subr.bf16.mxu0 0
    %227 = vmatpush1.bf16.msra.mxu0 0
    %228 = vmatprep.subr.bf16.mxu0 0
    %229 = vmatpush1.bf16.msra.mxu0 0
    %230 = vmatprep.subr.bf16.mxu0 0
    %231 = vmatpush1.bf16.msra.mxu0 0
    %232 = vmatprep.subr.bf16.mxu0 0
    %233 = vmatpush1.bf16.msra.mxu0 0
    %234 = vmatprep.subr.bf16.mxu0 0
    %235 = vmatpush1.bf16.msra.mxu0 0
    %236 = vmatprep.subr.bf16.mxu0 0
    %237 = vmatpush1.bf16.msra.mxu0 0
    %238 = vmatprep.subr.bf16.mxu0 0
    %239 = vmatpush1.bf16.msra.mxu0 0
    %240 = vmatprep.subr.bf16.mxu0 0
    %241 = vmatpush1.bf16.msra.mxu0 0
    %242 = vmatprep.subr.bf16.mxu0 0
    %243 = vmatpush1.bf16.msra.mxu0 0
    %244 = vmatprep.mubr.bf16.mxu0 0
    %245 = vmatmul.mubr.bf16.gmra.mrb[0].mxu0 %v210
    %v246 = vpop.f32.mrb[0].mxu0
    %v247 = vadd.f32 0.0, %v246
    %v248 = vpop.f32.mrb[0].mxu0
    %v249 = vpop.f32.mrb[0].mxu0
    %v250 = vadd.f32 0.0, %v249
    %v251 = vpop.f32.mrb[0].mxu0
    %252 = vdwg.mxu0
    %253 = vrot.lane.b32.xlu0 %v130, 120
    %v254 = vpop.permute.xlu0 %253
    %255 = vrot.lane.b32.xlu0 %v130, 88
    %v256 = vpop.permute.xlu0 %255
    %v258 = vsel %vm134, %v254, 0
    %v261 = vsel %vm134, %v256, 0
    %263 = vmatprep.subr.bf16.mxu0 0
    %264 = vmatpush1.bf16.xpose.msra.mxu0 %v261
    %265 = vmatprep.subr.bf16.mxu0 0
    %266 = vmatpush1.bf16.xpose.msra.mxu0 0
    %267 = vmatprep.subr.bf16.mxu0 0
    %268 = vmatpush1.bf16.xpose.msra.mxu0 0
    %269 = vmatprep.subr.bf16.mxu0 0
    %270 = vmatpush1.bf16.xpose.msra.mxu0 0
    %271 = vmatprep.subr.bf16.mxu0 0
    %272 = vmatpush1.bf16.xpose.msra.mxu0 0
    %273 = vmatprep.subr.bf16.mxu0 0
    %274 = vmatpush1.bf16.xpose.msra.mxu0 0
    %275 = vmatprep.subr.bf16.mxu0 0
    %276 = vmatpush1.bf16.xpose.msra.mxu0 0
    %277 = vmatprep.subr.bf16.mxu0 0
    %278 = vmatpush1.bf16.xpose.msra.mxu0 0
    %279 = vmatprep.subr.bf16.mxu0 0
    %280 = vmatpush1.bf16.xpose.msra.mxu0 0
    %281 = vmatprep.subr.bf16.mxu0 0
    %282 = vmatpush1.bf16.xpose.msra.mxu0 0
    %283 = vmatprep.subr.bf16.mxu0 0
    %284 = vmatpush1.bf16.xpose.msra.mxu0 0
    %285 = vmatprep.subr.bf16.mxu0 0
    %286 = vmatpush1.bf16.xpose.msra.mxu0 0
    %287 = vmatprep.subr.bf16.mxu0 0
    %288 = vmatpush1.bf16.xpose.msra.mxu0 0
    %289 = vmatprep.subr.bf16.mxu0 0
    %290 = vmatpush1.bf16.xpose.msra.mxu0 0
    %291 = vmatprep.subr.bf16.mxu0 0
    %292 = vmatpush1.bf16.xpose.msra.mxu0 0
    %293 = vmatprep.subr.bf16.mxu0 0
    %294 = vmatpush1.bf16.xpose.msra.mxu0 0
    %295 = vmatprep.mubr.bf16.mxu0 0
    %296 = vmatmul.mubr.bf16.gmra.mrb[0].mxu0 %v258
    %v297 = vpop.f32.mrb[0].mxu0
    %v298 = vadd.f32 %v27, %v297
    %v299 = vpop.f32.mrb[0].mxu0
    %v300 = vpop.f32.mrb[0].mxu0
    %v301 = vadd.f32 %v28, %v300
    %v302 = vpop.f32.mrb[0].mxu0
    %303 = vdwg.mxu0
    %v304 = vsel %vm182, %v298, -inf
    %305 = vmax.xlane.f32.xlu0 %v304
    %v306 = vpop.xlane.xlu0 %305
    %v307 = vsel %vm182, %v301, -inf
    %308 = vmax.xlane.f32.xlu0 %v307
    %v309 = vpop.xlane.xlu0 %308
    %v310 = vsub.f32 %v298, %v306
    %v311 = vsub.f32 %v301, %v309
    %v312 = vmul.f32 %v310, 1.442695
    %v313 = vpow.pop %v312
    %v314 = vmul.f32 %v311, 1.442695
    %v315 = vpow.pop %v314
    %v316 = vsel %vm182, %v313, 0.0
    %317 = vadd.xlane.f32.xlu0 %v316
    %v318 = vpop.xlane.xlu0 %317
    %v319 = vsel %vm182, %v315, 0.0
    %320 = vadd.xlane.f32.xlu0 %v319
    %v321 = vpop.xlane.xlu0 %320
    %v322 = vrcp.pop %v318
    %v323 = vrcp.pop %v321
    %v324 = vmul.f32 %v313, %v322
    %v325 = vmul.f32 %v315, %v323
    %v326 = vpack.c.bf16 %v325, %v324
    %327 = vrot.lane.b32.xlu0 %v130, 56
    %v328 = vpop.permute.xlu0 %327
    %v331 = vsel %vm182, %v326, 0
    %333 = vmatprep.subr.bf16.mxu0 0
    %334 = vmatpush1.bf16.msra.mxu0 %v328
    %335 = vmatprep.subr.bf16.mxu0 0
    %336 = vmatpush1.bf16.msra.mxu0 0
    %337 = vmatprep.subr.bf16.mxu0 0
    %338 = vmatpush1.bf16.msra.mxu0 0
    %339 = vmatprep.subr.bf16.mxu0 0
    %340 = vmatpush1.bf16.msra.mxu0 0
    %341 = vmatprep.subr.bf16.mxu0 0
    %342 = vmatpush1.bf16.msra.mxu0 0
    %343 = vmatprep.subr.bf16.mxu0 0
    %344 = vmatpush1.bf16.msra.mxu0 0
    %345 = vmatprep.subr.bf16.mxu0 0
    %346 = vmatpush1.bf16.msra.mxu0 0
    %347 = vmatprep.subr.bf16.mxu0 0
    %348 = vmatpush1.bf16.msra.mxu0 0
    %349 = vmatprep.subr.bf16.mxu0 0
    %350 = vmatpush1.bf16.msra.mxu0 0
    %351 = vmatprep.subr.bf16.mxu0 0
    %352 = vmatpush1.bf16.msra.mxu0 0
    %353 = vmatprep.subr.bf16.mxu0 0
    %354 = vmatpush1.bf16.msra.mxu0 0
    %355 = vmatprep.subr.bf16.mxu0 0
    %356 = vmatpush1.bf16.msra.mxu0 0
    %357 = vmatprep.subr.bf16.mxu0 0
    %358 = vmatpush1.bf16.msra.mxu0 0
    %359 = vmatprep.subr.bf16.mxu0 0
    %360 = vmatpush1.bf16.msra.mxu0 0
    %361 = vmatprep.subr.bf16.mxu0 0
    %362 = vmatpush1.bf16.msra.mxu0 0
    %363 = vmatprep.subr.bf16.mxu0 0
    %364 = vmatpush1.bf16.msra.mxu0 0
    %365 = vmatprep.mubr.bf16.mxu0 0
    %366 = vmatmul.mubr.bf16.gmra.mrb[0].mxu0 %v331
    %v367 = vpop.f32.mrb[0].mxu0
    %v368 = vadd.f32 0.0, %v367
    %v369 = vpop.f32.mrb[0].mxu0
    %v370 = vpop.f32.mrb[0].mxu0
    %v371 = vadd.f32 0.0, %v370
    %v372 = vpop.f32.mrb[0].mxu0
    %373 = vdwg.mxu0
    %374 = vrot.lane.b32.xlu0 %v130, 112
    %v375 = vpop.permute.xlu0 %374
    %376 = vrot.lane.b32.xlu0 %v130, 80
    %v377 = vpop.permute.xlu0 %376
    %v379 = vsel %vm134, %v375, 0
    %v382 = vsel %vm134, %v377, 0
    %384 = vmatprep.subr.bf16.mxu0 0
    %385 = vmatpush1.bf16.xpose.msra.mxu0 %v382
    %386 = vmatprep.subr.bf16.mxu0 0
    %387 = vmatpush1.bf16.xpose.msra.mxu0 0
    %388 = vmatprep.subr.bf16.mxu0 0
    %389 = vmatpush1.bf16.xpose.msra.mxu0 0
    %390 = vmatprep.subr.bf16.mxu0 0
    %391 = vmatpush1.bf16.xpose.msra.mxu0 0
    %392 = vmatprep.subr.bf16.mxu0 0
    %393 = vmatpush1.bf16.xpose.msra.mxu0 0
    %394 = vmatprep.subr.bf16.mxu0 0
    %395 = vmatpush1.bf16.xpose.msra.mxu0 0
    %396 = vmatprep.subr.bf16.mxu0 0
    %397 = vmatpush1.bf16.xpose.msra.mxu0 0
    %398 = vmatprep.subr.bf16.mxu0 0
    %399 = vmatpush1.bf16.xpose.msra.mxu0 0
    %400 = vmatprep.subr.bf16.mxu0 0
    %401 = vmatpush1.bf16.xpose.msra.mxu0 0
    %402 = vmatprep.subr.bf16.mxu0 0
    %403 = vmatpush1.bf16.xpose.msra.mxu0 0
    %404 = vmatprep.subr.bf16.mxu0 0
    %405 = vmatpush1.bf16.xpose.msra.mxu0 0
    %406 = vmatprep.subr.bf16.mxu0 0
    %407 = vmatpush1.bf16.xpose.msra.mxu0 0
    %408 = vmatprep.subr.bf16.mxu0 0
    %409 = vmatpush1.bf16.xpose.msra.mxu0 0
    %410 = vmatprep.subr.bf16.mxu0 0
    %411 = vmatpush1.bf16.xpose.msra.mxu0 0
    %412 = vmatprep.subr.bf16.mxu0 0
    %413 = vmatpush1.bf16.xpose.msra.mxu0 0
    %414 = vmatprep.subr.bf16.mxu0 0
    %415 = vmatpush1.bf16.xpose.msra.mxu0 0
    %416 = vmatprep.mubr.bf16.mxu0 0
    %417 = vmatmul.mubr.bf16.gmra.mrb[0].mxu0 %v379
    %v418 = vpop.f32.mrb[0].mxu0
    %v419 = vadd.f32 %v27, %v418
    %v420 = vpop.f32.mrb[0].mxu0
    %v421 = vpop.f32.mrb[0].mxu0
    %v422 = vadd.f32 %v28, %v421
    %v423 = vpop.f32.mrb[0].mxu0
    %424 = vdwg.mxu0
    %v425 = vsel %vm182, %v419, -inf
    %426 = vmax.xlane.f32.xlu0 %v425
    %v427 = vpop.xlane.xlu0 %426
    %v428 = vsel %vm182, %v422, -inf
    %429 = vmax.xlane.f32.xlu0 %v428
    %v430 = vpop.xlane.xlu0 %429
    %v431 = vsub.f32 %v419, %v427
    %v432 = vsub.f32 %v422, %v430
    %v433 = vmul.f32 %v431, 1.442695
    %v434 = vpow.pop %v433
    %v435 = vmul.f32 %v432, 1.442695
    %v436 = vpow.pop %v435
    %v437 = vsel %vm182, %v434, 0.0
    %438 = vadd.xlane.f32.xlu0 %v437
    %v439 = vpop.xlane.xlu0 %438
    %v440 = vsel %vm182, %v436, 0.0
    %441 = vadd.xlane.f32.xlu0 %v440
    %v442 = vpop.xlane.xlu0 %441
    %v443 = vrcp.pop %v439
    %v444 = vrcp.pop %v442
    %v445 = vmul.f32 %v434, %v443
    %v446 = vmul.f32 %v436, %v444
    %v447 = vpack.c.bf16 %v446, %v445
    %448 = vrot.lane.b32.xlu0 %v130, 48
    %v449 = vpop.permute.xlu0 %448
    %v452 = vsel %vm182, %v447, 0
    %454 = vmatprep.subr.bf16.mxu0 0
    %455 = vmatpush1.bf16.msra.mxu0 %v449
    %456 = vmatprep.subr.bf16.mxu0 0
    %457 = vmatpush1.bf16.msra.mxu0 0
    %458 = vmatprep.subr.bf16.mxu0 0
    %459 = vmatpush1.bf16.msra.mxu0 0
    %460 = vmatprep.subr.bf16.mxu0 0
    %461 = vmatpush1.bf16.msra.mxu0 0
    %462 = vmatprep.subr.bf16.mxu0 0
    %463 = vmatpush1.bf16.msra.mxu0 0
    %464 = vmatprep.subr.bf16.mxu0 0
    %465 = vmatpush1.bf16.msra.mxu0 0
    %466 = vmatprep.subr.bf16.mxu0 0
    %467 = vmatpush1.bf16.msra.mxu0 0
    %468 = vmatprep.subr.bf16.mxu0 0
    %469 = vmatpush1.bf16.msra.mxu0 0
    %470 = vmatprep.subr.bf16.mxu0 0
    %471 = vmatpush1.bf16.msra.mxu0 0
    %472 = vmatprep.subr.bf16.mxu0 0
    %473 = vmatpush1.bf16.msra.mxu0 0
    %474 = vmatprep.subr.bf16.mxu0 0
    %475 = vmatpush1.bf16.msra.mxu0 0
    %476 = vmatprep.subr.bf16.mxu0 0
    %477 = vmatpush1.bf16.msra.mxu0 0
    %478 = vmatprep.subr.bf16.mxu0 0
    %479 = vmatpush1.bf16.msra.mxu0 0
    %480 = vmatprep.subr.bf16.mxu0 0
    %481 = vmatpush1.bf16.msra.mxu0 0
    %482 = vmatprep.subr.bf16.mxu0 0
    %483 = vmatpush1.bf16.msra.mxu0 0
    %484 = vmatprep.subr.bf16.mxu0 0
    %485 = vmatpush1.bf16.msra.mxu0 0
    %486 = vmatprep.mubr.bf16.mxu0 0
    %487 = vmatmul.mubr.bf16.gmra.mrb[0].mxu0 %v452
    %v488 = vpop.f32.mrb[0].mxu0
    %v489 = vadd.f32 0.0, %v488
    %v490 = vpop.f32.mrb[0].mxu0
    %v491 = vpop.f32.mrb[0].mxu0
    %v492 = vadd.f32 0.0, %v491
    %v493 = vpop.f32.mrb[0].mxu0
    %494 = vdwg.mxu0
    %495 = vrot.lane.b32.xlu0 %v130, 104
    %v496 = vpop.permute.xlu0 %495
    %497 = vrot.lane.b32.xlu0 %v130, 72
    %v498 = vpop.permute.xlu0 %497
    %v500 = vsel %vm134, %v496, 0
    %v503 = vsel %vm134, %v498, 0
    %505 = vmatprep.subr.bf16.mxu0 0
    %506 = vmatpush1.bf16.xpose.msra.mxu0 %v503
    %507 = vmatprep.subr.bf16.mxu0 0
    %508 = vmatpush1.bf16.xpose.msra.mxu0 0
    %509 = vmatprep.subr.bf16.mxu0 0
    %510 = vmatpush1.bf16.xpose.msra.mxu0 0
    %511 = vmatprep.subr.bf16.mxu0 0
    %512 = vmatpush1.bf16.xpose.msra.mxu0 0
    %513 = vmatprep.subr.bf16.mxu0 0
    %514 = vmatpush1.bf16.xpose.msra.mxu0 0
    %515 = vmatprep.subr.bf16.mxu0 0
    %516 = vmatpush1.bf16.xpose.msra.mxu0 0
    %517 = vmatprep.subr.bf16.mxu0 0
    %518 = vmatpush1.bf16.xpose.msra.mxu0 0
    %519 = vmatprep.subr.bf16.mxu0 0
    %520 = vmatpush1.bf16.xpose.msra.mxu0 0
    %521 = vmatprep.subr.bf16.mxu0 0
    %522 = vmatpush1.bf16.xpose.msra.mxu0 0
    %523 = vmatprep.subr.bf16.mxu0 0
    %524 = vmatpush1.bf16.xpose.msra.mxu0 0
    %525 = vmatprep.subr.bf16.mxu0 0
    %526 = vmatpush1.bf16.xpose.msra.mxu0 0
    %527 = vmatprep.subr.bf16.mxu0 0
    %528 = vmatpush1.bf16.xpose.msra.mxu0 0
    %529 = vmatprep.subr.bf16.mxu0 0
    %530 = vmatpush1.bf16.xpose.msra.mxu0 0
    %531 = vmatprep.subr.bf16.mxu0 0
    %532 = vmatpush1.bf16.xpose.msra.mxu0 0
    %533 = vmatprep.subr.bf16.mxu0 0
    %534 = vmatpush1.bf16.xpose.msra.mxu0 0
    %535 = vmatprep.subr.bf16.mxu0 0
    %536 = vmatpush1.bf16.xpose.msra.mxu0 0
    %537 = vmatprep.mubr.bf16.mxu0 0
    %538 = vmatmul.mubr.bf16.gmra.mrb[0].mxu0 %v500
    %v539 = vpop.f32.mrb[0].mxu0
    %v540 = vadd.f32 %v27, %v539
    %v541 = vpop.f32.mrb[0].mxu0
    %v542 = vpop.f32.mrb[0].mxu0
    %v543 = vadd.f32 %v28, %v542
    %v544 = vpop.f32.mrb[0].mxu0
    %545 = vdwg.mxu0
    %v546 = vsel %vm182, %v540, -inf
    %547 = vmax.xlane.f32.xlu0 %v546
    %v548 = vpop.xlane.xlu0 %547
    %v549 = vsel %vm182, %v543, -inf
    %550 = vmax.xlane.f32.xlu0 %v549
    %v551 = vpop.xlane.xlu0 %550
    %v552 = vsub.f32 %v540, %v548
    %v553 = vsub.f32 %v543, %v551
    %v554 = vmul.f32 %v552, 1.442695
    %v555 = vpow.pop %v554
    %v556 = vmul.f32 %v553, 1.442695
    %v557 = vpow.pop %v556
    %v558 = vsel %vm182, %v555, 0.0
    %559 = vadd.xlane.f32.xlu0 %v558
    %v560 = vpop.xlane.xlu0 %559
    %v561 = vsel %vm182, %v557, 0.0
    %562 = vadd.xlane.f32.xlu0 %v561
    %v563 = vpop.xlane.xlu0 %562
    %v564 = vrcp.pop %v560
    %v565 = vrcp.pop %v563
    %v566 = vmul.f32 %v555, %v564
    %v567 = vmul.f32 %v557, %v565
    %v568 = vpack.c.bf16 %v567, %v566
    %569 = vrot.lane.b32.xlu0 %v130, 40
    %v570 = vpop.permute.xlu0 %569
    %v573 = vsel %vm182, %v568, 0
    %575 = vmatprep.subr.bf16.mxu0 0
    %576 = vmatpush1.bf16.msra.mxu0 %v570
    %577 = vmatprep.subr.bf16.mxu0 0
    %578 = vmatpush1.bf16.msra.mxu0 0
    %579 = vmatprep.subr.bf16.mxu0 0
    %580 = vmatpush1.bf16.msra.mxu0 0
    %581 = vmatprep.subr.bf16.mxu0 0
    %582 = vmatpush1.bf16.msra.mxu0 0
    %583 = vmatprep.subr.bf16.mxu0 0
    %584 = vmatpush1.bf16.msra.mxu0 0
    %585 = vmatprep.subr.bf16.mxu0 0
    %586 = vmatpush1.bf16.msra.mxu0 0
    %587 = vmatprep.subr.bf16.mxu0 0
    %588 = vmatpush1.bf16.msra.mxu0 0
    %589 = vmatprep.subr.bf16.mxu0 0
    %590 = vmatpush1.bf16.msra.mxu0 0
    %591 = vmatprep.subr.bf16.mxu0 0
    %592 = vmatpush1.bf16.msra.mxu0 0
    %593 = vmatprep.subr.bf16.mxu0 0
    %594 = vmatpush1.bf16.msra.mxu0 0
    %595 = vmatprep.subr.bf16.mxu0 0
    %596 = vmatpush1.bf16.msra.mxu0 0
    %597 = vmatprep.subr.bf16.mxu0 0
    %598 = vmatpush1.bf16.msra.mxu0 0
    %599 = vmatprep.subr.bf16.mxu0 0
    %600 = vmatpush1.bf16.msra.mxu0 0
    %601 = vmatprep.subr.bf16.mxu0 0
    %602 = vmatpush1.bf16.msra.mxu0 0
    %603 = vmatprep.subr.bf16.mxu0 0
    %604 = vmatpush1.bf16.msra.mxu0 0
    %605 = vmatprep.subr.bf16.mxu0 0
    %606 = vmatpush1.bf16.msra.mxu0 0
    %607 = vmatprep.mubr.bf16.mxu0 0
    %608 = vmatmul.mubr.bf16.gmra.mrb[0].mxu0 %v573
    %v609 = vpop.f32.mrb[0].mxu0
    %v610 = vadd.f32 0.0, %v609
    %v611 = vpop.f32.mrb[0].mxu0
    %v612 = vpop.f32.mrb[0].mxu0
    %v613 = vadd.f32 0.0, %v612
    %v614 = vpop.f32.mrb[0].mxu0
    %615 = vdwg.mxu0
    %618 = vrot.lane.b32.xlu0 %v368, 8
    %v619 = vpop.permute.xlu0 %618
    %620 = vrot.lane.b32.xlu0 %v371, 8
    %v621 = vpop.permute.xlu0 %620
    %626 = vrot.lane.b32.xlu0 %v489, 16
    %v627 = vpop.permute.xlu0 %626
    %628 = vrot.lane.b32.xlu0 %v492, 16
    %v629 = vpop.permute.xlu0 %628
    %634 = vrot.lane.b32.xlu0 %v610, 24
    %v635 = vpop.permute.xlu0 %634
    %636 = vrot.lane.b32.xlu0 %v613, 24
    %v637 = vpop.permute.xlu0 %636
    %v640 = vsel %vm134, %v247, %v619
    %v641 = vsel %vm134, %v250, %v621
    %v642 = vsel %vm182, %v640, %v627
    %v643 = vsel %vm182, %v641, %v629
    %vm644 = vcmask 195584
    %v645 = vsel %vm644, %v642, %v635
    %v646 = vsel %vm644, %v643, %v637
    %v647 = vpack.c.bf16 %v646, %v645
    %648 = vrot.lane.b32.xlu0 %v82, 32
    %v649 = vpop.permute.xlu0 %648
    %650 = vrot.lane.b32.xlu0 %v83, 32
    %v651 = vpop.permute.xlu0 %650
    %654 = vrot.lane.b32.xlu0 %v64, 64
    %v655 = vpop.permute.xlu0 %654
    %v658 = vsel %vm33, %v647, 0
    %660 = vmatprep.subr.bf16.mxu0 0
    %661 = vmatpush1.bf16.msra.mxu0 %v649
    %662 = vmatprep.subr.bf16.mxu0 0
    %663 = vmatpush1.bf16.msra.mxu0 %v651
    %664 = vmatprep.subr.bf16.mxu0 0
    %665 = vmatpush1.bf16.msra.mxu0 0
    %666 = vmatprep.subr.bf16.mxu0 0
    %667 = vmatpush1.bf16.msra.mxu0 0
    %668 = vmatprep.subr.bf16.mxu0 0
    %669 = vmatpush1.bf16.msra.mxu0 0
    %670 = vmatprep.subr.bf16.mxu0 0
    %671 = vmatpush1.bf16.msra.mxu0 0
    %672 = vmatprep.subr.bf16.mxu0 0
    %673 = vmatpush1.bf16.msra.mxu0 0
    %674 = vmatprep.subr.bf16.mxu0 0
    %675 = vmatpush1.bf16.msra.mxu0 0
    %676 = vmatprep.subr.bf16.mxu0 0
    %677 = vmatpush1.bf16.msra.mxu0 0
    %678 = vmatprep.subr.bf16.mxu0 0
    %679 = vmatpush1.bf16.msra.mxu0 0
    %680 = vmatprep.subr.bf16.mxu0 0
    %681 = vmatpush1.bf16.msra.mxu0 0
    %682 = vmatprep.subr.bf16.mxu0 0
    %683 = vmatpush1.bf16.msra.mxu0 0
    %684 = vmatprep.subr.bf16.mxu0 0
    %685 = vmatpush1.bf16.msra.mxu0 0
    %686 = vmatprep.subr.bf16.mxu0 0
    %687 = vmatpush1.bf16.msra.mxu0 0
    %688 = vmatprep.subr.bf16.mxu0 0
    %689 = vmatpush1.bf16.msra.mxu0 0
    %690 = vmatprep.subr.bf16.mxu0 0
    %691 = vmatpush1.bf16.msra.mxu0 0
    %692 = vmatprep.mubr.bf16.mxu0 0
    %693 = vmatmul.mubr.bf16.gmra.mrb[0].mxu0 %v658
    %v694 = vpop.f32.mrb[0].mxu0
    %v695 = vadd.f32 %v655, %v694
    %v696 = vpop.f32.mrb[0].mxu0
    %v697 = vpop.f32.mrb[0].mxu0
    %v698 = vadd.f32 %v655, %v697
    %v699 = vpop.f32.mrb[0].mxu0
    %700 = vdwg.mxu0
    %v701 = vadd.f32 %v22, %v695
    %v702 = vadd.f32 %v23, %v698
    %v703 = vsel %vm33, %v701, 0.0
    %704 = vadd.xlane.f32.xlu0 %v703
    %v705 = vpop.xlane.xlu0 %704
    %v706 = vsel %vm33, %v702, 0.0
    %707 = vadd.xlane.f32.xlu0 %v706
    %v708 = vpop.xlane.xlu0 %707
    %v709 = vmul.f32 %v705, %v40
    %v710 = vmul.f32 %v708, %v40
    %v711 = vsub.f32 %v701, %v709
    %v712 = vsub.f32 %v702, %v710
    %v713 = vmul.f32 %v711, %v711
    %v714 = vmul.f32 %v712, %v712
    %v715 = vsel %vm33, %v713, 0.0
    %716 = vadd.xlane.f32.xlu0 %v715
    %v717 = vpop.xlane.xlu0 %716
    %v718 = vsel %vm33, %v714, 0.0
    %719 = vadd.xlane.f32.xlu0 %v718
    %v720 = vpop.xlane.xlu0 %719
    %v721 = vmul.f32 %v717, %v40
    %v722 = vmul.f32 %v720, %v40
    %v723 = vadd.f32 %v721, 1e-05
    %v724 = vadd.f32 %v722, 1e-05
    %v725 = vrsqrt.pop %v723
    %v726 = vrsqrt.pop %v724
    %v727 = vmul.f32 %v711, %v725
    %v728 = vmul.f32 %v712, %v726
    %729 = vrot.lane.b32.xlu0 %v64, 32
    %v730 = vpop.permute.xlu0 %729
    %v732 = vmul.f32 %v727, %v730
    %v733 = vmul.f32 %v728, %v730
    %v734 = vlaneseq
    %v735 = vshrl.u32 %v734, 7
    %v736 = vsub.s32 0, %v735
    %v737 = vrot.slane %v25, %v736
    %v738 = vadd.f32 %v732, %v737
    %v739 = vadd.f32 %v733, %v737
    %v740 = vpack.c.bf16 %v739, %v738
    %v741 = vld [vmem:[%s2] sm:$0xf]
    %v742 = vld [vmem:[%s2 + $0x4] sm:$0xf]
    %v743 = vld [vmem:[%s2 + $0x8] sm:$0xf]
    %v744 = vld [vmem:[%s2 + $0xc] sm:$0xf]
    %v745 = vlaneseq
    %v746 = vshrl.u32 %v745, 7
    %v747 = vsub.s32 0, %v746
    %v748 = vrot.slane %v26, %v747
    %v753 = vunpack.c.l.b16 %v741
    %v754 = vunpack.c.l.b16 %v742
    %v755 = vunpack.c.l.b16 %v743
    %v756 = vunpack.c.l.b16 %v744
    %v757 = vpack.c.b16 %v754, %v753
    %v758 = vpack.c.b16 %v756, %v755
    %v762 = vsel %vm33, %v740, 0
    %764 = vmatprep.subr.bf16.mxu0 0
    %765 = vmatpush1.bf16.msra.mxu0 %v757
    %766 = vmatprep.subr.bf16.mxu0 0
    %767 = vmatpush1.bf16.msra.mxu0 %v758
    %768 = vmatprep.subr.bf16.mxu0 0
    %769 = vmatpush1.bf16.msra.mxu0 0
    %770 = vmatprep.subr.bf16.mxu0 0
    %771 = vmatpush1.bf16.msra.mxu0 0
    %772 = vmatprep.subr.bf16.mxu0 0
    %773 = vmatpush1.bf16.msra.mxu0 0
    %774 = vmatprep.subr.bf16.mxu0 0
    %775 = vmatpush1.bf16.msra.mxu0 0
    %776 = vmatprep.subr.bf16.mxu0 0
    %777 = vmatpush1.bf16.msra.mxu0 0
    %778 = vmatprep.subr.bf16.mxu0 0
    %779 = vmatpush1.bf16.msra.mxu0 0
    %780 = vmatprep.subr.bf16.mxu0 0
    %781 = vmatpush1.bf16.msra.mxu0 0
    %782 = vmatprep.subr.bf16.mxu0 0
    %783 = vmatpush1.bf16.msra.mxu0 0
    %784 = vmatprep.subr.bf16.mxu0 0
    %785 = vmatpush1.bf16.msra.mxu0 0
    %786 = vmatprep.subr.bf16.mxu0 0
    %787 = vmatpush1.bf16.msra.mxu0 0
    %788 = vmatprep.subr.bf16.mxu0 0
    %789 = vmatpush1.bf16.msra.mxu0 0
    %790 = vmatprep.subr.bf16.mxu0 0
    %791 = vmatpush1.bf16.msra.mxu0 0
    %792 = vmatprep.subr.bf16.mxu0 0
    %793 = vmatpush1.bf16.msra.mxu0 0
    %794 = vmatprep.subr.bf16.mxu0 0
    %795 = vmatpush1.bf16.msra.mxu0 0
    %796 = vmatprep.mubr.bf16.mxu0 0
    %797 = vmatmul.mubr.bf16.gmra.mrb[0].mxu0 %v762
    %v798 = vpop.f32.mrb[0].mxu0
    %v799 = vadd.f32 %v748, %v798
    %v800 = vpop.f32.mrb[0].mxu0
    %v801 = vpop.f32.mrb[0].mxu0
    %v802 = vadd.f32 %v748, %v801
    %v803 = vpop.f32.mrb[0].mxu0
    %804 = vdwg.mxu0
    %v805 = vmax.f32 %v799, 0.0
    %v806 = vmax.f32 %v802, 0.0
    %v807 = vpack.c.bf16 %v806, %v805
    %v808 = vld [vmem:[%s3] sm:$0xf]
    %v809 = vld [vmem:[%s3 + $0x4] sm:$0xf]
    %v810 = vld [vmem:[%s3 + $0x8] sm:$0xf]
    %v811 = vld [vmem:[%s3 + $0xc] sm:$0xf]
    %v812 = vld [vmem:[%s3 + $0x10] sm:$0xf]
    %v813 = vld [vmem:[%s3 + $0x14] sm:$0xf]
    %v814 = vld [vmem:[%s3 + $0x18] sm:$0xf]
    %v815 = vld [vmem:[%s3 + $0x1c] sm:$0xf]
    %v816 = vld [vmem:[%s3 + $0x20] sm:$0xf]
    %v817 = vld [vmem:[%s3 + $0x24] sm:$0xf]
    %v818 = vld [vmem:[%s3 + $0x28] sm:$0xf]
    %v819 = vld [vmem:[%s3 + $0x2c] sm:$0xf]
    %v820 = vld [vmem:[%s3 + $0x30] sm:$0xf]
    %v821 = vld [vmem:[%s3 + $0x34] sm:$0xf]
    %v822 = vld [vmem:[%s3 + $0x38] sm:$0xf]
    %v823 = vld [vmem:[%s3 + $0x3c] sm:$0xf]
    %v840 = vunpack.c.l.b16 %v808
    %v841 = vunpack.c.l.b16 %v809
    %v842 = vunpack.c.l.b16 %v810
    %v843 = vunpack.c.l.b16 %v811
    %v844 = vunpack.c.l.b16 %v812
    %v845 = vunpack.c.l.b16 %v813
    %v846 = vunpack.c.l.b16 %v814
    %v847 = vunpack.c.l.b16 %v815
    %v848 = vunpack.c.l.b16 %v816
    %v849 = vunpack.c.l.b16 %v817
    %v850 = vunpack.c.l.b16 %v818
    %v851 = vunpack.c.l.b16 %v819
    %v852 = vunpack.c.l.b16 %v820
    %v853 = vunpack.c.l.b16 %v821
    %v854 = vunpack.c.l.b16 %v822
    %v855 = vunpack.c.l.b16 %v823
    %v856 = vpack.c.b16 %v841, %v840
    %v857 = vpack.c.b16 %v843, %v842
    %v858 = vpack.c.b16 %v845, %v844
    %v859 = vpack.c.b16 %v847, %v846
    %v860 = vpack.c.b16 %v849, %v848
    %v861 = vpack.c.b16 %v851, %v850
    %v862 = vpack.c.b16 %v853, %v852
    %v863 = vpack.c.b16 %v855, %v854
    %873 = vrot.lane.b32.xlu0 %v737, 96
    %v874 = vpop.permute.xlu0 %873
    %876 = vmatprep.subr.bf16.mxu0 0
    %877 = vmatpush1.bf16.msra.mxu0 %v856
    %878 = vmatprep.subr.bf16.mxu0 0
    %879 = vmatpush1.bf16.msra.mxu0 %v857
    %880 = vmatprep.subr.bf16.mxu0 0
    %881 = vmatpush1.bf16.msra.mxu0 %v858
    %882 = vmatprep.subr.bf16.mxu0 0
    %883 = vmatpush1.bf16.msra.mxu0 %v859
    %884 = vmatprep.subr.bf16.mxu0 0
    %885 = vmatpush1.bf16.msra.mxu0 %v860
    %886 = vmatprep.subr.bf16.mxu0 0
    %887 = vmatpush1.bf16.msra.mxu0 %v861
    %888 = vmatprep.subr.bf16.mxu0 0
    %889 = vmatpush1.bf16.msra.mxu0 %v862
    %890 = vmatprep.subr.bf16.mxu0 0
    %891 = vmatpush1.bf16.msra.mxu0 %v863
    %892 = vmatprep.subr.bf16.mxu0 0
    %893 = vmatpush1.bf16.msra.mxu0 0
    %894 = vmatprep.subr.bf16.mxu0 0
    %895 = vmatpush1.bf16.msra.mxu0 0
    %896 = vmatprep.subr.bf16.mxu0 0
    %897 = vmatpush1.bf16.msra.mxu0 0
    %898 = vmatprep.subr.bf16.mxu0 0
    %899 = vmatpush1.bf16.msra.mxu0 0
    %900 = vmatprep.subr.bf16.mxu0 0
    %901 = vmatpush1.bf16.msra.mxu0 0
    %902 = vmatprep.subr.bf16.mxu0 0
    %903 = vmatpush1.bf16.msra.mxu0 0
    %904 = vmatprep.subr.bf16.mxu0 0
    %905 = vmatpush1.bf16.msra.mxu0 0
    %906 = vmatprep.subr.bf16.mxu0 0
    %907 = vmatpush1.bf16.msra.mxu0 0
    %908 = vmatprep.mubr.bf16.mxu0 0
    %909 = vmatmul.mubr.bf16.gmra.mrb[0].mxu0 %v807
    %v910 = vpop.f32.mrb[0].mxu0
    %v911 = vadd.f32 %v874, %v910
    %v912 = vpop.f32.mrb[0].mxu0
    %v913 = vpop.f32.mrb[0].mxu0
    %v914 = vadd.f32 %v874, %v913
    %v915 = vpop.f32.mrb[0].mxu0
    %916 = vdwg.mxu0
    %v917 = vadd.f32 %v701, %v911
    %v918 = vadd.f32 %v702, %v914
    %919 = vst.msk [vmem:[#allocation2] sm:$0xff] %vm33, %v917
    %920 = vst.msk [vmem:[#allocation2 + $0x8] sm:$0xff] %vm33, %v918
    // Predicated region
    $region22: #{tpu_custom_call.1} parent=1 // pred_check
      _
    $region23: #{tpu_custom_call.1} parent=1 // pred_check_branch
      %922 = sbr.rel (0) target = $region25
    $region24: #{tpu_custom_call.1} parent=1 // pred_region
      %s924 = ssub.s32 256, 256
      %925 = vsyncadd [#allocation3], %s924
      %s926 = sshll.u32 [#allocation2], 4
      %s927 = int_to_ptr.vmem [resolvable:$true] %s926
      %932 = dma.vmem_to_hbm [thread:$0]  %s927, 256, %s5, [#allocation3], 128, 128, 8
    $region25: #{tpu_custom_call.1} parent=1 // pred_fallthru
      _
    // Predicated region
    $region26: #{tpu_custom_call.1} parent=1 // pred_check
      _
    $region27: #{tpu_custom_call.1} parent=1 // pred_check_branch
      %934 = sbr.rel (0) target = $region29
    $region28: #{tpu_custom_call.1} parent=1 // pred_region
      %935 = dma.done [#allocation3], 256
    $region29: #{tpu_custom_call.1} parent=1 // pred_fallthru
      _
    %936 = vsyncpa [#allocation3], 1

</llo_original>
